<compile_context>
chip_gen: v7x
topology: tpu7x:2x2x1
jax: 0.10.0
libtpu: 0.0.40
codegen_flags: <defaults>
</compile_context>

<pallas_src>
import jax
import jax.numpy as jnp
from jax.experimental import pallas as pl
from jax.experimental.pallas import tpu as pltpu


# ------------------------------ tiling helpers -------------------------------

_TARGET_TILE_BYTES = 2 << 20  # ~2 MiB per streaming buffer


def _largest_divisor_multiple(dim: int, align: int, upper: int) -> int:
    """Largest multiple of `align` that divides `dim` and is <= upper (>= align)."""
    best = align
    upper = min(upper, dim)
    t = align
    while t <= upper:
        if dim % t == 0:
            best = t
        t += align
    return best


def _pick_c_tile(C: int, itemsize: int, rows_per_block: int) -> int:
    """Lane-dim tile: multiple of 128 dividing C, sized to ~_TARGET_TILE_BYTES."""
    if C % 128 != 0:
        # Block must span the full (non-128-aligned) channel dim to be legal.
        return C
    max_tc = max(128, _TARGET_TILE_BYTES // max(1, rows_per_block * itemsize))
    return _largest_divisor_multiple(C, 128, max_tc)


def _pick_l_tile(L: int, itemsize: int, tc: int) -> int:
    """Sublane-dim tile for the elementwise (denorm) pass."""
    sub_align = max(8, 32 // itemsize)  # 8 for f32, 16 for bf16, 32 for int8
    if L % sub_align != 0:
        return L  # full extent is always legal
    max_tl = max(sub_align, _TARGET_TILE_BYTES // max(1, tc * itemsize))
    return _largest_divisor_multiple(L, sub_align, max_tl)


def _vmem_limit_bytes(*block_nbytes: int) -> int:
    # Each streamed block is double-buffered by the Pallas pipeline.
    need = 2 * sum(block_nbytes) + (2 << 20)  # + headroom for small blocks/scratch
    return int(min(max(need, 16 << 20), 64 << 20))


# ------------------------------ kernels ---------------------------------------


def _revin_norm_kernel(x_ref, bias_ref, y_ref, mean_ref):
    # x_ref:    (1, L, TC) block (full L so the reduction is local)
    # bias_ref: (1, 1, TC) affine bias (broadcast over B and L)
    # y_ref:    (1, L, TC) normalized output
    # mean_ref: (1, 1, TC) per-(batch, channel) mean over L
    x = x_ref[...]
    mean32 = jnp.mean(x.astype(jnp.float32), axis=1, keepdims=True)  # f32 accumulate
    mean = mean32.astype(mean_ref.dtype)
    mean_ref[...] = mean
    y_ref[...] = x - mean + bias_ref[...]


def _revin_denorm_kernel(x_ref, mean_ref, bias_ref, y_ref):
    # Pure streaming elementwise: y = x - affine_bias + mean
    y_ref[...] = x_ref[...] - bias_ref[...] + mean_ref[...]


# ------------------------------ wrappers ---------------------------------------


def revin_mean_norm(x, affine_bias):
    """mode='norm'. Returns (y, mean) where mean is the saved statistic."""
    B, L, C = x.shape
    itemsize = jnp.dtype(x.dtype).itemsize
    bias3 = affine_bias.reshape(1, 1, C).astype(x.dtype)

    tc = _pick_c_tile(C, itemsize, rows_per_block=L)
    nc = C // tc
    x_blk_bytes = L * tc * itemsize
    small_blk_bytes = tc * itemsize
    vmem_limit = _vmem_limit_bytes(x_blk_bytes, x_blk_bytes,  # x in, y out
                                   small_blk_bytes, small_blk_bytes)  # bias, mean

    y, mean = pl.pallas_call(
        _revin_norm_kernel,
        out_shape=(
            jax.ShapeDtypeStruct((B, L, C), x.dtype),
            jax.ShapeDtypeStruct((B, 1, C), x.dtype),
        ),
        grid_spec=pltpu.PrefetchScalarGridSpec(
            num_scalar_prefetch=0,
            grid=(B, nc),
            in_specs=[
                pl.BlockSpec((1, L, tc), lambda b, c: (b, 0, c)),
                pl.BlockSpec((1, 1, tc), lambda b, c: (0, 0, c)),
            ],
            out_specs=[
                pl.BlockSpec((1, L, tc), lambda b, c: (b, 0, c)),
                pl.BlockSpec((1, 1, tc), lambda b, c: (b, 0, c)),
            ],
        ),
        compiler_params=pltpu.CompilerParams(
            dimension_semantics=("parallel", "parallel"),
            vmem_limit_bytes=vmem_limit,
        ),
    )(x, bias3)
    return y, mean


def revin_mean_denorm(x, mean, affine_bias):
    """mode='denorm'. `mean` is the statistic saved from the 'norm' pass."""
    B, L, C = x.shape
    itemsize = jnp.dtype(x.dtype).itemsize
    bias3 = affine_bias.reshape(1, 1, C).astype(x.dtype)
    mean = mean.astype(x.dtype)

    tc = _pick_c_tile(C, itemsize, rows_per_block=1)
    tc = min(tc, _pick_c_tile(C, itemsize, rows_per_block=8))  # keep lane tiles modest
    tl = _pick_l_tile(L, itemsize, tc)
    nc = C // tc
    nl = L // tl
    x_blk_bytes = tl * tc * itemsize
    small_blk_bytes = tc * itemsize
    vmem_limit = _vmem_limit_bytes(x_blk_bytes, x_blk_bytes,
                                   small_blk_bytes, small_blk_bytes)

    y = pl.pallas_call(
        _revin_denorm_kernel,
        out_shape=jax.ShapeDtypeStruct((B, L, C), x.dtype),
        grid_spec=pltpu.PrefetchScalarGridSpec(
            num_scalar_prefetch=0,
            grid=(B, nl, nc),
            in_specs=[
                pl.BlockSpec((1, tl, tc), lambda b, l, c: (b, l, c)),
                pl.BlockSpec((1, 1, tc), lambda b, l, c: (b, 0, c)),
                pl.BlockSpec((1, 1, tc), lambda b, l, c: (0, 0, c)),
            ],
            out_specs=pl.BlockSpec((1, tl, tc), lambda b, l, c: (b, l, c)),
        ),
        compiler_params=pltpu.CompilerParams(
            dimension_semantics=("parallel", "parallel", "parallel"),
            vmem_limit_bytes=vmem_limit,
        ),
    )(x, mean, bias3)
    return y


class RevINMeanPallas:
    """Mirrors the PyTorch RevINMean module (mean-only RevIN, affine bias)."""

    def __init__(self, num_features: int, eps: float = 1e-5, affine: bool = True):
        self.num_features = num_features
        self.eps = eps  # kept for API parity; unused (mean-only, no scaling)
        self.affine = affine
        # deterministic init: PyTorch initializes affine_bias to zeros
        self.affine_bias = jnp.zeros((num_features,), dtype=jnp.float32)
        self.mean = None

    def __call__(self, x, mode: str):
        bias = self.affine_bias if self.affine else jnp.zeros(
            (self.num_features,), dtype=x.dtype
        )
        if mode == "norm":
            y, mean = revin_mean_norm(x, bias)
            self.mean = mean
            return y
        elif mode == "denorm":
            if self.mean is None:
                raise RuntimeError("call with mode='norm' first to compute statistics")
            return revin_mean_denorm(x, self.mean, bias)
        else:
            raise NotImplementedError


# ------------------------------ demo / check -----------------------------------

if __name__ == "__main__":
    key = jax.random.PRNGKey(0)

    # Case 1 exercises the 128-multiple channel-tiling path; case 2 exercises the
    # narrow-channel (full-extent lane block) fallback.
    for (B, L, C) in [(2, 16, 256), (2, 8, 32)]:
        key, sub = jax.random.split(key)
        x = jax.random.normal(sub, (B, L, C), dtype=jnp.float32)

        model = RevINMeanPallas(num_features=C, eps=1e-5, affine=True)
        # non-trivial deterministic bias so both branches are exercised
        model.affine_bias = jnp.arange(C, dtype=jnp.float32) * 0.01

        y_norm = model(x, "norm")
        y_denorm = model(y_norm, "denorm")
        jax.block_until_ready((y_norm, y_denorm))

        # pure-JAX reference
        mean_ref = jnp.mean(x, axis=1, keepdims=True)
        bias_ref = model.affine_bias.reshape(1, 1, C)
        y_norm_ref = x - mean_ref + bias_ref
        y_denorm_ref = y_norm_ref - bias_ref + mean_ref  # round-trips back to x

        assert jnp.allclose(model.mean, mean_ref, atol=1e-5, rtol=1e-5)
        assert jnp.allclose(y_norm, y_norm_ref, atol=1e-5, rtol=1e-5)
        assert jnp.allclose(y_denorm, y_denorm_ref, atol=1e-5, rtol=1e-5)
        assert jnp.allclose(y_denorm, x, atol=1e-5, rtol=1e-5)

    print("KERNEL_OK")
</pallas_src>

<mosaic_0001>
module attributes {stable_mosaic.version = 11 : i64} {
  func.func @_revin_norm_kernel(%arg0: i32, %arg1: i32, %arg2: memref<1x16x256xf32, #tpu.memory_space<vmem>>, %arg3: memref<1x1x256xf32, #tpu.memory_space<vmem>>, %arg4: memref<1x16x256xf32, #tpu.memory_space<vmem>>, %arg5: memref<1x1x256xf32, #tpu.memory_space<vmem>>) attributes {dimension_semantics = [#tpu.dimension_semantics<parallel>, #tpu.dimension_semantics<parallel>], iteration_bounds = array<i64: 2, 1>, scalar_prefetch = 0 : i64, scratch_operands = 0 : i64, tpu.core_type = #tpu.core_type<tc>, window_params = [{transform_indices = @transform_0, window_bounds = array<i64: 1, 16, 256>}, {transform_indices = @transform_1, window_bounds = array<i64: 1, 1, 256>}, {transform_indices = @transform_2, window_bounds = array<i64: 1, 16, 256>}, {transform_indices = @transform_3, window_bounds = array<i64: 1, 1, 256>}]} {
    %c0 = arith.constant 0 : index
    %c0_0 = arith.constant 0 : index
    %c0_1 = arith.constant 0 : index
    %0 = vector.load %arg2[%c0, %c0_0, %c0_1] : memref<1x16x256xf32, #tpu.memory_space<vmem>>, vector<1x16x256xf32>
    %cst = arith.constant dense<0.000000e+00> : vector<1x256xf32>
    %1 = vector.multi_reduction <add>, %0, %cst [1] : vector<1x16x256xf32> to vector<1x256xf32>
    %2 = vector.shape_cast %1 : vector<1x256xf32> to vector<1x1x256xf32>
    %cst_2 = arith.constant 1.600000e+01 : f32
    %3 = vector.broadcast %cst_2 : f32 to vector<1x1x256xf32>
    %4 = arith.divf %2, %3 : vector<1x1x256xf32>
    %c0_3 = arith.constant 0 : index
    %c0_4 = arith.constant 0 : index
    %c0_5 = arith.constant 0 : index
    %5 = vector.load %arg5[%c0_3, %c0_4, %c0_5] : memref<1x1x256xf32, #tpu.memory_space<vmem>>, vector<1x1x256xf32>
    tpu.vector_store %arg5[%c0_3, %c0_4, %c0_5], %4 {strides = array<i32>} : memref<1x1x256xf32, #tpu.memory_space<vmem>>, vector<1x1x256xf32>,
    %6 = vector.broadcast %4 : vector<1x1x256xf32> to vector<1x16x256xf32>
    %7 = arith.subf %0, %6 : vector<1x16x256xf32>
    %c0_6 = arith.constant 0 : index
    %c0_7 = arith.constant 0 : index
    %c0_8 = arith.constant 0 : index
    %8 = vector.load %arg3[%c0_6, %c0_7, %c0_8] : memref<1x1x256xf32, #tpu.memory_space<vmem>>, vector<1x1x256xf32>
    %9 = vector.broadcast %8 : vector<1x1x256xf32> to vector<1x16x256xf32>
    %10 = arith.addf %7, %9 : vector<1x16x256xf32>
    %c0_9 = arith.constant 0 : index
    %c0_10 = arith.constant 0 : index
    %c0_11 = arith.constant 0 : index
    %11 = vector.load %arg4[%c0_9, %c0_10, %c0_11] : memref<1x16x256xf32, #tpu.memory_space<vmem>>, vector<1x16x256xf32>
    tpu.vector_store %arg4[%c0_9, %c0_10, %c0_11], %10 {strides = array<i32>} : memref<1x16x256xf32, #tpu.memory_space<vmem>>, vector<1x16x256xf32>,
    return
  }
  func.func @transform_0(%arg0: i32, %arg1: i32) -> (i32, i32, i32) {
    %c0_i32 = arith.constant 0 : i32
    %c0_i32_0 = arith.constant 0 : i32
    return %arg0, %c0_i32, %arg1 : i32, i32, i32
  }
  func.func @transform_1(%arg0: i32, %arg1: i32) -> (i32, i32, i32) {
    %c0_i32 = arith.constant 0 : i32
    %c0_i32_0 = arith.constant 0 : i32
    %c0_i32_1 = arith.constant 0 : i32
    return %c0_i32, %c0_i32_0, %arg1 : i32, i32, i32
  }
  func.func @transform_2(%arg0: i32, %arg1: i32) -> (i32, i32, i32) {
    %c0_i32 = arith.constant 0 : i32
    %c0_i32_0 = arith.constant 0 : i32
    return %arg0, %c0_i32, %arg1 : i32, i32, i32
  }
  func.func @transform_3(%arg0: i32, %arg1: i32) -> (i32, i32, i32) {
    %c0_i32 = arith.constant 0 : i32
    %c0_i32_0 = arith.constant 0 : i32
    return %arg0, %c0_i32, %arg1 : i32, i32, i32
  }
}

</mosaic_0001>

<llo_original>
// kernel: tpu_custom_call.1
$region0: #{tpu_custom_call.1}
  #allocation0 [shape = 'u32[]', space=smem, size = 0x4, offset = 0x4, fixed_abs, tag = 'smem constant byte address 0x4 - core index']
  #allocation1 [shape = 'u32[144,128]{1,0:T(1,128)}', space=vmem, size = 0x12000, scoped, tag = 'internal scratch']
  %s0 = inlined_call_operand.hbm [shape: f32[2,16,256], index: 0, kind: input, shape index: {}]
  %s1 = inlined_call_operand.vmem [shape: f32[1,1,256], index: 1, kind: input, shape index: {}]
  %s2 = inlined_call_operand.hbm [shape: f32[2,16,256], index: 2, kind: output, shape index: {0}]
  %s3 = inlined_call_operand.hbm [shape: f32[2,1,256], index: 3, kind: output, shape index: {1}]
  %4 = xla_tuple %s2, %s3
  %s5 = sld [smem:[#allocation0]]
  $region53: #{tpu_custom_call.1} parent=0
    _
  %s7 = ssub.s32 1, %s5
  %s8 = scalar_select 0, %s7, %s5
  $region1: #{tpu_custom_call.1} parent=0
    #allocation2 [shape = 'u8[32768]{0}', space=vmem, size = 0x8000, scoped, tag = 'input window, operand 0']
    #allocation3 [shape = 's32[2]{0}', space=sflag, size = 0x8, scoped, tag = 'scoped memory for tpu_custom_call.1']
    #allocation4 [shape = 's32[2]{0}', space=sflag, size = 0x8, scoped, tag = 'scoped memory for tpu_custom_call.1']
    #allocation5 [shape = 'u8[32768]{0}', space=vmem, size = 0x8000, scoped, tag = 'output window, operand 0']
    #allocation6 [shape = 'u8[2048]{0}', space=vmem, size = 0x800, scoped, tag = 'output window, operand 1']
    #allocation7 [shape = 's32[2]{0}', space=sflag, size = 0x8, scoped, tag = 'scoped memory for tpu_custom_call.1']
    %9 = vsyncpa [#allocation3], 0
    %s10 = scalar_lea.sflag [#allocation3], 1
    %11 = vsyncpa %s10, 0
    %12 = vsyncpa [#allocation4], 0
    %s13 = scalar_lea.sflag [#allocation4], 1
    %14 = vsyncpa %s13, 0
    %15 = vsyncpa [#allocation7], 0
    %s16 = scalar_lea.sflag [#allocation7], 1
    %17 = vsyncpa %s16, 0
    loop: start=0, step=1, limit=4
    $region2: #{tpu_custom_call.1} parent=1 // loop_pre_header
      _
    $region3: #{tpu_custom_call.1} parent=1 // loop_header
      %s19 = sphi 0, %s23
      %p20 = scmp.ge.s32.totalorder %s19, 4
      %s26 = sphi 0, %s38
      %s27 = sphi 0, %s34
      %s28 = sphi 0, %s26
      %s29 = sphi 0, %s27
      %s30 = sphi 0, %s28
      %s31 = sphi 0, %s29
      %s43 = sphi 0, %s45
      %s46 = sphi 0, %s43
      %s47 = sphi 0, %s46
      %s63 = sphi 0, %s47
      %s69 = sphi 0, %s71
      %s72 = sphi 0, %s69
      %s73 = sphi 0, %s72
      %s89 = sphi 0, %s73
      %s97 = sphi 0, %s99
      %s100 = sphi 0, %s97
      %s101 = sphi 0, %s100
      %s117 = sphi 0, %s101
      %s125 = sphi 0, %s127
      %s128 = sphi 0, %s125
      %s129 = sphi 0, %s128
      %s145 = sphi 0, %s129
    $region4: #{tpu_custom_call.1} parent=1 // loop_header_branch
      %22 = sbr.rel (%p20) target = $region8
    $region5: #{tpu_custom_call.1} parent=1 // loop_body
      %s24 = ssub.s32 %s19, 1
      %s25 = ssub.s32 %s19, 2
      %s32 = sadd.s32 1, %s27
      %p33 = scmp.ge.s32.totalorder %s32, 1
      %s34 = scalar_select %p33, 0, %s32
      %s35 = sadd.s32 1, %s26
      %s36 = scalar_select %p33, %s35, %s26
      %p37 = scmp.ge.s32.totalorder %s36, 2
      %s38 = scalar_select %p37, 0, %s36
      %s39 = ssub.s32 %s26, %s38
      %s40 = ssub.s32 %s27, %s34
      %s41 = sor.u32 %s39, %s40
      %p42 = scmp.eq.s32.totalorder %s41, 0
      %s44 = sadd.s32 %s43, 1
      %s45 = scalar_select %p42, %s43, %s44
      %p48 = pneg %p42
      %p49 = scmp.eq.s32.totalorder %s19, 1
      %p50 = por %p48, %p49
      %p51 = scmp.ne.s32.totalorder %s43, %s46
      %p52 = scmp.eq.s32.totalorder %s19, 0
      %p53 = por %p51, %p52
      %p54 = scmp.ne.s32.totalorder %s43, %s46
      %p55 = scmp.eq.s32.totalorder %s24, 1
      %p56 = por %p54, %p55
      %p57 = scmp.ne.s32.totalorder %s46, %s47
      %p58 = scmp.eq.s32.totalorder %s24, 0
      %p59 = por %p57, %p58
      %p60 = scmp.ne.s32.totalorder %s46, %s47
      %p61 = scmp.eq.s32.totalorder %s25, 1
      %p62 = por %p60, %p61
      %p64 = scmp.ne.s32.totalorder %s47, %s63
      %p65 = scmp.eq.s32.totalorder %s25, 0
      %p66 = por %p64, %p65
      %s67 = ssub.s32 %s27, %s34
      %p68 = scmp.eq.s32.totalorder %s67, 0
      %s70 = sadd.s32 %s69, 1
      %s71 = scalar_select %p68, %s69, %s70
      %p74 = pneg %p68
      %p75 = scmp.eq.s32.totalorder %s19, 1
      %p76 = por %p74, %p75
      %p77 = scmp.ne.s32.totalorder %s69, %s72
      %p78 = scmp.eq.s32.totalorder %s19, 0
      %p79 = por %p77, %p78
      %p80 = scmp.ne.s32.totalorder %s69, %s72
      %p81 = scmp.eq.s32.totalorder %s24, 1
      %p82 = por %p80, %p81
      %p83 = scmp.ne.s32.totalorder %s72, %s73
      %p84 = scmp.eq.s32.totalorder %s24, 0
      %p85 = por %p83, %p84
      %p86 = scmp.ne.s32.totalorder %s72, %s73
      %p87 = scmp.eq.s32.totalorder %s25, 1
      %p88 = por %p86, %p87
      %p90 = scmp.ne.s32.totalorder %s73, %s89
      %p91 = scmp.eq.s32.totalorder %s25, 0
      %p92 = por %p90, %p91
      %s93 = ssub.s32 %s26, %s38
      %s94 = ssub.s32 %s27, %s34
      %s95 = sor.u32 %s93, %s94
      %p96 = scmp.eq.s32.totalorder %s95, 0
      %s98 = sadd.s32 %s97, 1
      %s99 = scalar_select %p96, %s97, %s98
      %p102 = pneg %p96
      %p103 = scmp.eq.s32.totalorder %s19, 1
      %p104 = por %p102, %p103
      %p105 = scmp.ne.s32.totalorder %s97, %s100
      %p106 = scmp.eq.s32.totalorder %s19, 0
      %p107 = por %p105, %p106
      %p108 = scmp.ne.s32.totalorder %s97, %s100
      %p109 = scmp.eq.s32.totalorder %s24, 1
      %p110 = por %p108, %p109
      %p111 = scmp.ne.s32.totalorder %s100, %s101
      %p112 = scmp.eq.s32.totalorder %s24, 0
      %p113 = por %p111, %p112
      %p114 = scmp.ne.s32.totalorder %s100, %s101
      %p115 = scmp.eq.s32.totalorder %s25, 1
      %p116 = por %p114, %p115
      %p118 = scmp.ne.s32.totalorder %s101, %s117
      %p119 = scmp.eq.s32.totalorder %s25, 0
      %p120 = por %p118, %p119
      %s121 = ssub.s32 %s26, %s38
      %s122 = ssub.s32 %s27, %s34
      %s123 = sor.u32 %s121, %s122
      %p124 = scmp.eq.s32.totalorder %s123, 0
      %s126 = sadd.s32 %s125, 1
      %s127 = scalar_select %p124, %s125, %s126
      %p130 = pneg %p124
      %p131 = scmp.eq.s32.totalorder %s19, 1
      %p132 = por %p130, %p131
      %p133 = scmp.ne.s32.totalorder %s125, %s128
      %p134 = scmp.eq.s32.totalorder %s19, 0
      %p135 = por %p133, %p134
      %p136 = scmp.ne.s32.totalorder %s125, %s128
      %p137 = scmp.eq.s32.totalorder %s24, 1
      %p138 = por %p136, %p137
      %p139 = scmp.ne.s32.totalorder %s128, %s129
      %p140 = scmp.eq.s32.totalorder %s24, 0
      %p141 = por %p139, %p140
      %p142 = scmp.ne.s32.totalorder %s128, %s129
      %p143 = scmp.eq.s32.totalorder %s25, 1
      %p144 = por %p142, %p143
      %p146 = scmp.ne.s32.totalorder %s129, %s145
      %p147 = scmp.eq.s32.totalorder %s25, 0
      %p148 = por %p146, %p147
      %p149 = scmp.le.s32.totalorder 1, %s19
      %p150 = scmp.lt.s32.totalorder %s19, 3
      %p151 = pnand %p149, %p150
      %p152 = pneg %p151
      // Predicated region
      $region9: #{tpu_custom_call.1} parent=5 // pred_check
        _
      $region10: #{tpu_custom_call.1} parent=5 // pred_check_branch
        %154 = sbr.rel (%p151) target = $region12
      $region11: #{tpu_custom_call.1} parent=5 // pred_region
        %s155 = ssub.s32 %s19, 1
        // Predicated region
        $region13: #{tpu_custom_call.1} parent=11 // pred_check
          %p156 = pneg %p85
        $region14: #{tpu_custom_call.1} parent=11 // pred_check_branch
          %158 = sbr.rel (%p156) target = $region16
        $region15: #{tpu_custom_call.1} parent=11 // pred_region
          %s159 = smul.u32 2, %s29
          %p160 = scmp.lt.s32.totalorder %s159, 1
          %s161 = scalar_select %p160, %s159, 1
          %s162 = scalar_lea.vmem %s1, %s161
          %s163 = smul.u32 2, %s29
        $region16: #{tpu_custom_call.1} parent=11 // pred_fallthru
          _
      $region12: #{tpu_custom_call.1} parent=5 // pred_fallthru
        _
      %p164 = scmp.lt.s32.totalorder %s19, 2
      // Predicated region
      $region17: #{tpu_custom_call.1} parent=5 // pred_check
        %p165 = pneg %p164
      $region18: #{tpu_custom_call.1} parent=5 // pred_check_branch
        %167 = sbr.rel (%p165) target = $region20
      $region19: #{tpu_custom_call.1} parent=5 // pred_region
        // Predicated region
        $region21: #{tpu_custom_call.1} parent=19 // pred_check
          %p168 = pneg %p53
        $region22: #{tpu_custom_call.1} parent=19 // pred_check_branch
          %170 = sbr.rel (%p168) target = $region24
        $region23: #{tpu_custom_call.1} parent=19 // pred_region
          %s171 = sand.u32 %s43, 1
          %s172 = scalar_lea.sflag [#allocation3], %s171
          %s173 = sand.u32 %s43, 1
          %s174 = smul.addr %s173, 32
          %s175 = scalar_lea.vmem [#allocation2], %s174
          %s176 = smul.u32 2, %s27
          %s178 = ssub.s32 512, 512
          %179 = vsyncadd %s172, %s178
          %s180 = smul.addr %s26, 4
          %s181 = sadd.s32 %s176, %s180
          %s182 = smul.addr %s181, 128
          %s183 = scalar_lea.hbm %s0, %s182
          %s184 = sshll.u32 %s175, 4
          %s185 = int_to_ptr.vmem [resolvable:$true] %s184
          %190 = dma.hbm_to_vmem [thread:$0]  %s183, 512, %s185, %s172, 256, 256, 16
        $region24: #{tpu_custom_call.1} parent=19 // pred_fallthru
          _
      $region20: #{tpu_custom_call.1} parent=5 // pred_fallthru
        _
      %p191 = scmp.le.s32.totalorder 1, %s19
      %p192 = scmp.lt.s32.totalorder %s19, 3
      %p193 = pnand %p191, %p192
      %p194 = pneg %p193
      // Predicated region
      $region25: #{tpu_custom_call.1} parent=5 // pred_check
        _
      $region26: #{tpu_custom_call.1} parent=5 // pred_check_branch
        %196 = sbr.rel (%p193) target = $region28
      $region27: #{tpu_custom_call.1} parent=5 // pred_region
        %s197 = ssub.s32 %s19, 1
        %s198 = sand.u32 %s46, 1
        %s199 = scalar_lea.sflag [#allocation3], %s198
        %s200 = sand.u32 %s46, 1
        %s201 = smul.addr %s200, 32
        %s202 = scalar_lea.vmem [#allocation2], %s201
        // Predicated region
        $region29: #{tpu_custom_call.1} parent=27 // pred_check
          %p203 = pneg %p59
        $region30: #{tpu_custom_call.1} parent=27 // pred_check_branch
          %205 = sbr.rel (%p203) target = $region32
        $region31: #{tpu_custom_call.1} parent=27 // pred_region
          %206 = dma.done %s199, 512
        $region32: #{tpu_custom_call.1} parent=27 // pred_fallthru
          _
        %s207 = sand.u32 %s46, 1
        %s208 = scalar_lea.sflag [#allocation3], %s207
        %s209 = sand.u32 %s46, 1
        %s210 = smul.addr %s209, 32
        %s211 = scalar_lea.vmem [#allocation2], %s210
        %p212 = pneg %p59
        %p213 = pneg %p56
        %s214 = smul.u32 2, %s29
        %p215 = scmp.lt.s32.totalorder %s214, 1
        %s216 = scalar_select %p215, %s214, 1
        %s217 = scalar_lea.vmem %s1, %s216
        %p218 = pneg %p85
        %p219 = pneg %p82
        %p220 = pneg %p113
        %p221 = pneg %p110
        %s222 = sand.u32 %s100, 1
        %s223 = scalar_lea.sflag [#allocation4], %s222
        %s224 = sand.u32 %s100, 1
        %s225 = smul.addr %s224, 32
        %s226 = scalar_lea.vmem [#allocation5], %s225
        %p227 = pneg %p141
        %p228 = pneg %p138
        %s229 = sand.u32 %s128, 1
        %s230 = scalar_lea.sflag [#allocation7], %s229
        %s231 = sand.u32 %s128, 1
        %s232 = smul.addr %s231, 2
        %s233 = scalar_lea.vmem [#allocation6], %s232
        %s234 = smul.u32 2, %s29
        %s235 = smul.u32 2, %s29
        %p236 = scmp.lt.s32.totalorder %s235, 1
        %s237 = scalar_select %p236, %s235, 1
        %s238 = scalar_lea.vmem %s1, %s237
        %s239 = smul.u32 2, %s29
        %s240 = smul.u32 2, %s29
        %s241 = smul.u32 2, %s29
        %v242 = vld [vmem:[%s202] sm:$0xff]
        %v243 = vld [vmem:[%s202 + $0x8] sm:$0xff]
        %v244 = vld [vmem:[%s202 + $0x10] sm:$0xff]
        %v245 = vld [vmem:[%s202 + $0x18] sm:$0xff]
        %v246 = vadd.f32 %v242, %v244
        %v247 = vrot.slane %v246, 4
        %v248 = vadd.f32 %v246, %v247
        %v249 = vrot.slane %v248, 2
        %v250 = vadd.f32 %v248, %v249
        %v251 = vrot.slane %v250, 1
        %v252 = vadd.f32 %v250, %v251
        %v253 = vadd.f32 %v243, %v245
        %v254 = vrot.slane %v253, 4
        %v255 = vadd.f32 %v253, %v254
        %v256 = vrot.slane %v255, 2
        %v257 = vadd.f32 %v255, %v256
        %v258 = vrot.slane %v257, 1
        %v259 = vadd.f32 %v257, %v258
        %v260 = vrcp.pop 16.0
        %v261 = vmul.f32 %v252, %v260
        %v262 = vmul.f32 %v259, %v260
        %v265 = vcombine.low %v261, %v262
        %v267 = vunpack.c.l.s4 1966171168
        %v268 = vunpack.c.0.s8 %v267
        %v269 = vlaneseq
        %v270 = vshrl.u32 %v269, 7
        %v271 = vsub.s32 %v268, %v270
        %v272 = vrot.slane %v265, %v271
        %v274 = vunpack.c.l.s4 1966171168
        %v275 = vunpack.c.0.s8 %v274
        %v276 = vlaneseq
        %v277 = vshrl.u32 %v276, 7
        %v278 = vsub.s32 %v275, %v277
        %v279 = vrot.slane %v272, %v278
        %v281 = vlaneseq
        %vm282 = vcmp.ge.s32.totalorder %v281, 0
        %vm283 = vcmp.lt.s32.totalorder %v281, 256
        %vm284 = vmand %vm282, %vm283
        %285 = vst.msk [vmem:[%s233] sm:$0x3] %vm284, %v279
        %v286 = vsub.f32 %v242, %v261
        %v287 = vsub.f32 %v243, %v262
        %v288 = vsub.f32 %v244, %v261
        %v289 = vsub.f32 %v245, %v262
        %v290 = vld [vmem:[%s238] sm:$0x3]
        %v292 = vlaneseq
        %v293 = vshrl.u32 %v292, 7
        %v294 = vsub.s32 0, %v293
        %v295 = vrot.slane %v290, %v294
        %v296 = vlaneseq
        %v297 = vshrl.u32 %v296, 7
        %v298 = vsub.s32 1, %v297
        %v299 = vrot.slane %v290, %v298
        %v302 = vadd.f32 %v286, %v295
        %v303 = vadd.f32 %v287, %v299
        %v304 = vadd.f32 %v288, %v295
        %v305 = vadd.f32 %v289, %v299
        %306 = vst [vmem:[%s226] sm:$0xff] %v302
        %307 = vst [vmem:[%s226 + $0x8] sm:$0xff] %v303
        %308 = vst [vmem:[%s226 + $0x10] sm:$0xff] %v304
        %309 = vst [vmem:[%s226 + $0x18] sm:$0xff] %v305
        %s310 = sand.u32 %s100, 1
        %s311 = scalar_lea.sflag [#allocation4], %s310
        %s312 = sand.u32 %s100, 1
        %s313 = smul.addr %s312, 32
        %s314 = scalar_lea.vmem [#allocation5], %s313
        %s315 = sand.u32 %s128, 1
        %s316 = scalar_lea.sflag [#allocation7], %s315
        %s317 = sand.u32 %s128, 1
        %s318 = smul.addr %s317, 2
        %s319 = scalar_lea.vmem [#allocation6], %s318
        // Predicated region
        $region33: #{tpu_custom_call.1} parent=27 // pred_check
          %p320 = pneg %p110
        $region34: #{tpu_custom_call.1} parent=27 // pred_check_branch
          %322 = sbr.rel (%p320) target = $region36
        $region35: #{tpu_custom_call.1} parent=27 // pred_region
          %s323 = smul.u32 2, %s29
          %s325 = ssub.s32 512, 512
          %326 = vsyncadd %s311, %s325
          %s327 = smul.addr %s28, 4
          %s328 = sadd.s32 %s323, %s327
          %s329 = smul.addr %s328, 128
          %s330 = scalar_lea.hbm %s2, %s329
          %s331 = sshll.u32 %s314, 4
          %s332 = int_to_ptr.vmem [resolvable:$true] %s331
          %337 = dma.vmem_to_hbm [thread:$0]  %s332, 512, %s330, %s311, 256, 256, 16
        $region36: #{tpu_custom_call.1} parent=27 // pred_fallthru
          _
        // Predicated region
        $region37: #{tpu_custom_call.1} parent=27 // pred_check
          %p338 = pneg %p138
        $region38: #{tpu_custom_call.1} parent=27 // pred_check_branch
          %340 = sbr.rel (%p338) target = $region40
        $region39: #{tpu_custom_call.1} parent=27 // pred_region
          %s341 = smul.u32 2, %s29
          %s343 = ssub.s32 32, 32
          %344 = vsyncadd %s316, %s343
          %s345 = smul.addr %s28, 2
          %s346 = sadd.s32 %s341, %s345
          %s347 = smul.addr %s346, 16
          %s348 = scalar_lea.hbm %s3, %s347
          %s350 = sshll.u32 %s319, 4
          %s351 = int_to_ptr.vmem [resolvable:$true] %s350
          %353 = dma.vmem_to_hbm [thread:$0]  %s351, 32, %s348, %s316
        $region40: #{tpu_custom_call.1} parent=27 // pred_fallthru
          _
      $region28: #{tpu_custom_call.1} parent=5 // pred_fallthru
        _
      %p354 = scmp.le.s32.totalorder 2, %s19
      // Predicated region
      $region41: #{tpu_custom_call.1} parent=5 // pred_check
        %p355 = pneg %p354
      $region42: #{tpu_custom_call.1} parent=5 // pred_check_branch
        %357 = sbr.rel (%p355) target = $region44
      $region43: #{tpu_custom_call.1} parent=5 // pred_region
        %s358 = ssub.s32 %s19, 2
        // Predicated region
        $region45: #{tpu_custom_call.1} parent=43 // pred_check
          %p359 = pneg %p116
        $region46: #{tpu_custom_call.1} parent=43 // pred_check_branch
          %361 = sbr.rel (%p359) target = $region48
        $region47: #{tpu_custom_call.1} parent=43 // pred_region
          %s362 = sand.u32 %s101, 1
          %s363 = scalar_lea.sflag [#allocation4], %s362
          %s364 = sand.u32 %s101, 1
          %s365 = smul.addr %s364, 32
          %s366 = scalar_lea.vmem [#allocation5], %s365
          %367 = dma.done %s363, 512
        $region48: #{tpu_custom_call.1} parent=43 // pred_fallthru
          _
        // Predicated region
        $region49: #{tpu_custom_call.1} parent=43 // pred_check
          %p368 = pneg %p144
        $region50: #{tpu_custom_call.1} parent=43 // pred_check_branch
          %370 = sbr.rel (%p368) target = $region52
        $region51: #{tpu_custom_call.1} parent=43 // pred_region
          %s371 = sand.u32 %s129, 1
          %s372 = scalar_lea.sflag [#allocation7], %s371
          %s373 = sand.u32 %s129, 1
          %s374 = smul.addr %s373, 2
          %s375 = scalar_lea.vmem [#allocation6], %s374
          %376 = dma.done %s372, 32
        $region52: #{tpu_custom_call.1} parent=43 // pred_fallthru
          _
      $region44: #{tpu_custom_call.1} parent=5 // pred_fallthru
        _
    $region6: #{tpu_custom_call.1} parent=1 // loop_footer
      %s23 = sadd.s32 1, %s19
    $region7: #{tpu_custom_call.1} parent=1 // loop_footer_branch
      %18 = sbr.rel target = $region3
    $region8: #{tpu_custom_call.1} parent=1 // loop_exit
      _
    %377 = vsyncpa [#allocation3], 1
    %s378 = scalar_lea.sflag [#allocation3], 1
    %379 = vsyncpa %s378, 1
    %380 = vsyncpa [#allocation4], 1
    %s381 = scalar_lea.sflag [#allocation4], 1
    %382 = vsyncpa %s381, 1
    %383 = vsyncpa [#allocation7], 1
    %s384 = scalar_lea.sflag [#allocation7], 1
    %385 = vsyncpa %s384, 1

</llo_original>
